<compile_context>
chip_gen: v5e
topology: v5e:2x2
jax: 0.10.0
libtpu: 0.0.40
codegen_flags: <defaults>
</compile_context>

<pallas_src>
import jax
import jax.numpy as jnp
from jax.experimental import pallas as pl
from jax.experimental.pallas import tpu as pltpu


def _round_up(v, m):
    return ((v + m - 1) // m) * m


def make_mlp_kernel(n_layers):
    """Fused MLP kernel; refs = (x, W0, b0, W1, b1, ..., out)."""

    def kernel(*refs):
        x_ref = refs[0]
        param_refs = refs[1:1 + 2 * n_layers]
        o_ref = refs[1 + 2 * n_layers]

        # x arrives f32 / unpadded; cast to bf16 in-kernel (VPU) — no HBM round-trip.
        h = x_ref[...].astype(jnp.bfloat16)
        for i in range(n_layers):
            w = param_refs[2 * i][...]                    # bf16, VMEM-resident
            b = param_refs[2 * i + 1][...]                # f32 (1, n_out_padded)
            acc = jnp.dot(h, w, preferred_element_type=jnp.float32) + b
            if i < n_layers - 1:                          # nonlin == F.relu
                h = jnp.maximum(acc, 0.0).astype(jnp.bfloat16)
            else:                                         # last layer: pre-activation
                o_ref[...] = acc.astype(o_ref.dtype)

    return kernel


def prepare_net2_params(weights, biases, param_dtype=jnp.bfloat16):
    """One-time (init-path) padding + cast of the Net2 parameters.

    weights[i]: [in_i, out_i]   (transpose of PyTorch nn.Linear.weight)
    biases[i]:  [out_i] or [1, out_i]

    The layer-0 K dim stays unpadded (its BlockSpec block equals the full array dim,
    which is exempt from the (8,128) rule).  Hidden/output feature dims are zero-padded
    to multiples of 128 so every in-kernel load/store is lane-dense.  Zero-padded weight
    rows / bias columns keep padded lanes exactly zero through ReLU, so results are exact.
    """
    n_layers = len(weights)
    dims = [int(weights[0].shape[0])] + [int(w.shape[1]) for w in weights]
    pdims = [dims[0]] + [_round_up(d, 128) for d in dims[1:]]

    padded = []
    for i, (w, b) in enumerate(zip(weights, biases)):
        k_in, k_out = dims[i], dims[i + 1]
        wp = jnp.zeros((pdims[i], pdims[i + 1]), param_dtype)
        wp = wp.at[:k_in, :k_out].set(w.astype(param_dtype))
        bp = jnp.zeros((1, pdims[i + 1]), jnp.float32)
        bp = bp.at[:, :k_out].set(jnp.reshape(b, (1, -1)).astype(jnp.float32))
        padded += [wp, bp]
    padded = jax.block_until_ready(tuple(padded))          # materialize once at init
    return padded, tuple(dims), tuple(pdims)


def net2_forward(x, prepped, *, batch_tile=256, out_dtype=jnp.bfloat16,
                 trim_output=True):
    """Fused Net2 forward in a single pipelined pallas_call.

    x:        [batch, widths[0]]  float32 (unpadded, uncast — handled in-kernel)
    prepped:  output of prepare_net2_params (cached padded bf16 weights / f32 biases)
    Returns:  [batch, widths[-1]] in out_dtype (last pre-activation).  Pass
              trim_output=False to get the lane-padded slab and skip the slice op.

    batch_tile: pick so the grid is 1 step on v5e/v6e (single TC) and an even number
    of steps on v7x (2 TCs, "parallel" batch axis).
    """
    params, dims, pdims = prepped
    n_layers = len(dims) - 1
    batch, in_dim = x.shape
    assert in_dim == dims[0], "x feature dim does not match layer-0 width"

    # Batch tiling; bf16 activations pack 16 sublanes per vreg -> round to 16.
    tb = min(batch_tile, _round_up(batch, 16))
    pbatch = _round_up(batch, tb)
    if pbatch != batch:                                    # rare: batch % tb != 0
        x = jnp.pad(x, ((0, pbatch - batch), (0, 0)))
    grid = (pbatch // tb,)

    in_specs = [pl.BlockSpec((tb, pdims[0]), lambda i: (i, 0))]   # x tile
    for li in range(n_layers):
        in_specs.append(pl.BlockSpec((pdims[li], pdims[li + 1]), lambda i: (0, 0)))
        in_specs.append(pl.BlockSpec((1, pdims[li + 1]), lambda i: (0, 0)))

    # Advisory cost estimate for XLA's scheduler.
    flops = 2 * pbatch * sum(pdims[i] * pdims[i + 1] for i in range(n_layers))
    bytes_accessed = (
        x.size * x.dtype.itemsize
        + sum(p.size * p.dtype.itemsize for p in params)
        + pbatch * pdims[-1] * jnp.dtype(out_dtype).itemsize
    )

    out_padded = pl.pallas_call(
        make_mlp_kernel(n_layers),
        out_shape=jax.ShapeDtypeStruct((pbatch, pdims[-1]), out_dtype),
        grid=grid,
        in_specs=in_specs,
        out_specs=pl.BlockSpec((tb, pdims[-1]), lambda i: (i, 0)),
        compiler_params=pltpu.CompilerParams(
            dimension_semantics=("parallel",),
        ),
        cost_estimate=pl.CostEstimate(
            flops=flops, transcendentals=0, bytes_accessed=bytes_accessed
        ),
    )(x, *params)

    if not trim_output:
        return out_padded
    out = out_padded[:batch] if pbatch != batch else out_padded
    return out[:, :dims[-1]] if pdims[-1] != dims[-1] else out


def init_params(key, widths):
    """Deterministic init matching nn.Linear shapes: W_i [out,in] -> stored [in,out]."""
    weights, biases = [], []
    for w_in, w_out in zip(widths[:-1], widths[1:]):
        key, kw, kb = jax.random.split(key, 3)
        bound = 1.0 / (w_in ** 0.5)      # mimic PyTorch's default uniform init range
        weights.append(jax.random.uniform(kw, (w_in, w_out), jnp.float32, -bound, bound))
        biases.append(jax.random.uniform(kb, (1, w_out), jnp.float32, -bound, bound))
    return weights, biases


def net2_reference(x, weights, biases, param_dtype=jnp.bfloat16):
    """Plain-JAX reference mirroring the kernel's bf16-storage / f32-accum recipe."""
    h = x.astype(param_dtype)
    for i, (w, b) in enumerate(zip(weights, biases)):
        acc = jnp.dot(h, w.astype(param_dtype), preferred_element_type=jnp.float32)
        acc = acc + jnp.reshape(b, (1, -1)).astype(jnp.float32)
        if i < len(weights) - 1:
            h = jnp.maximum(acc, 0.0).astype(param_dtype)
        else:
            return acc


if __name__ == "__main__":
    key = jax.random.PRNGKey(0)

    # Net2(dims, widths): widths define the MLP layer sizes.  Small example shapes.
    widths = [32, 64, 48, 16]
    batch = 64

    key, kx, kp = jax.random.split(key, 3)
    x = jax.random.normal(kx, (batch, widths[0]), dtype=jnp.float32)
    weights, biases = init_params(kp, widths)

    # One-time parameter padding/cast (hoisted out of the forward call path).
    prepped = prepare_net2_params(weights, biases)

    out = net2_forward(x, prepped)
    out = jax.block_until_ready(out)

    ref = net2_reference(x, weights, biases)
    assert out.shape == (batch, widths[-1])
    assert jnp.allclose(out.astype(jnp.float32), ref, atol=2e-2, rtol=2e-2), \
        "mismatch vs reference"

    print("KERNEL_OK")
</pallas_src>

<mosaic_0001>
module attributes {stable_mosaic.version = 11 : i64} {
  func.func @kernel(%arg0: i32, %arg1: memref<64x32xf32, #tpu.memory_space<vmem>>, %arg2: memref<32x128xbf16, #tpu.memory_space<vmem>>, %arg3: memref<1x128xf32, #tpu.memory_space<vmem>>, %arg4: memref<128x128xbf16, #tpu.memory_space<vmem>>, %arg5: memref<1x128xf32, #tpu.memory_space<vmem>>, %arg6: memref<128x128xbf16, #tpu.memory_space<vmem>>, %arg7: memref<1x128xf32, #tpu.memory_space<vmem>>, %arg8: memref<64x128xbf16, #tpu.memory_space<vmem>>) attributes {dimension_semantics = [#tpu.dimension_semantics<parallel>], iteration_bounds = array<i64: 1>, scalar_prefetch = 0 : i64, scratch_operands = 0 : i64, tpu.core_type = #tpu.core_type<tc>, window_params = [{transform_indices = @transform_0, window_bounds = array<i64: 64, 32>}, {pipeline_mode = #tpu.pipeline_mode<synchronous>, transform_indices = @transform_1, window_bounds = array<i64: 32, 128>}, {pipeline_mode = #tpu.pipeline_mode<synchronous>, transform_indices = @transform_2, window_bounds = array<i64: 1, 128>}, {pipeline_mode = #tpu.pipeline_mode<synchronous>, transform_indices = @transform_3, window_bounds = array<i64: 128, 128>}, {pipeline_mode = #tpu.pipeline_mode<synchronous>, transform_indices = @transform_4, window_bounds = array<i64: 1, 128>}, {pipeline_mode = #tpu.pipeline_mode<synchronous>, transform_indices = @transform_5, window_bounds = array<i64: 128, 128>}, {pipeline_mode = #tpu.pipeline_mode<synchronous>, transform_indices = @transform_6, window_bounds = array<i64: 1, 128>}, {transform_indices = @transform_7, window_bounds = array<i64: 64, 128>}]} {
    %c0 = arith.constant 0 : index
    %c0_0 = arith.constant 0 : index
    %0 = vector.load %arg1[%c0, %c0_0] : memref<64x32xf32, #tpu.memory_space<vmem>>, vector<64x32xf32>
    %1 = arith.truncf %0 : vector<64x32xf32> to vector<64x32xbf16>
    %c0_1 = arith.constant 0 : index
    %c0_2 = arith.constant 0 : index
    %2 = vector.load %arg2[%c0_1, %c0_2] : memref<32x128xbf16, #tpu.memory_space<vmem>>, vector<32x128xbf16>
    %c0_3 = arith.constant 0 : index
    %c0_4 = arith.constant 0 : index
    %3 = vector.load %arg3[%c0_3, %c0_4] : memref<1x128xf32, #tpu.memory_space<vmem>>, vector<1x128xf32>
    %cst = arith.constant dense<0.000000e+00> : vector<64x128xf32>
    %4 = tpu.matmul %1, %2, %cst {dimension_numbers = #tpu.dot_dimension_numbers<[1], [0], [0], [1], [0, 0, 1, 1], [], []>} : vector<64x32xbf16>, vector<32x128xbf16>, vector<64x128xf32> -> vector<64x128xf32>
    %5 = vector.broadcast %3 : vector<1x128xf32> to vector<64x128xf32>
    %6 = arith.addf %4, %5 : vector<64x128xf32>
    %cst_5 = arith.constant 0.000000e+00 : f32
    %7 = vector.broadcast %cst_5 : f32 to vector<64x128xf32>
    %8 = arith.maximumf %6, %7 : vector<64x128xf32>
    %9 = arith.truncf %8 : vector<64x128xf32> to vector<64x128xbf16>
    %c0_6 = arith.constant 0 : index
    %c0_7 = arith.constant 0 : index
    %10 = vector.load %arg4[%c0_6, %c0_7] : memref<128x128xbf16, #tpu.memory_space<vmem>>, vector<128x128xbf16>
    %c0_8 = arith.constant 0 : index
    %c0_9 = arith.constant 0 : index
    %11 = vector.load %arg5[%c0_8, %c0_9] : memref<1x128xf32, #tpu.memory_space<vmem>>, vector<1x128xf32>
    %cst_10 = arith.constant dense<0.000000e+00> : vector<64x128xf32>
    %12 = tpu.matmul %9, %10, %cst_10 {dimension_numbers = #tpu.dot_dimension_numbers<[1], [0], [0], [1], [0, 0, 1, 1], [], []>} : vector<64x128xbf16>, vector<128x128xbf16>, vector<64x128xf32> -> vector<64x128xf32>
    %13 = vector.broadcast %11 : vector<1x128xf32> to vector<64x128xf32>
    %14 = arith.addf %12, %13 : vector<64x128xf32>
    %cst_11 = arith.constant 0.000000e+00 : f32
    %15 = vector.broadcast %cst_11 : f32 to vector<64x128xf32>
    %16 = arith.maximumf %14, %15 : vector<64x128xf32>
    %17 = arith.truncf %16 : vector<64x128xf32> to vector<64x128xbf16>
    %c0_12 = arith.constant 0 : index
    %c0_13 = arith.constant 0 : index
    %18 = vector.load %arg6[%c0_12, %c0_13] : memref<128x128xbf16, #tpu.memory_space<vmem>>, vector<128x128xbf16>
    %c0_14 = arith.constant 0 : index
    %c0_15 = arith.constant 0 : index
    %19 = vector.load %arg7[%c0_14, %c0_15] : memref<1x128xf32, #tpu.memory_space<vmem>>, vector<1x128xf32>
    %cst_16 = arith.constant dense<0.000000e+00> : vector<64x128xf32>
    %20 = tpu.matmul %17, %18, %cst_16 {dimension_numbers = #tpu.dot_dimension_numbers<[1], [0], [0], [1], [0, 0, 1, 1], [], []>} : vector<64x128xbf16>, vector<128x128xbf16>, vector<64x128xf32> -> vector<64x128xf32>
    %21 = vector.broadcast %19 : vector<1x128xf32> to vector<64x128xf32>
    %22 = arith.addf %20, %21 : vector<64x128xf32>
    %23 = arith.truncf %22 : vector<64x128xf32> to vector<64x128xbf16>
    %c0_17 = arith.constant 0 : index
    %c0_18 = arith.constant 0 : index
    %24 = vector.load %arg8[%c0_17, %c0_18] : memref<64x128xbf16, #tpu.memory_space<vmem>>, vector<64x128xbf16>
    tpu.vector_store %arg8[%c0_17, %c0_18], %23 {strides = array<i32>} : memref<64x128xbf16, #tpu.memory_space<vmem>>, vector<64x128xbf16>,
    return
  }
  func.func @transform_0(%arg0: i32) -> (i32, i32) {
    %c0_i32 = arith.constant 0 : i32
    %c0_i32_0 = arith.constant 0 : i32
    return %arg0, %c0_i32 : i32, i32
  }
  func.func @transform_1(%arg0: i32) -> (i32, i32) {
    %c0_i32 = arith.constant 0 : i32
    %c0_i32_0 = arith.constant 0 : i32
    %c0_i32_1 = arith.constant 0 : i32
    return %c0_i32, %c0_i32_0 : i32, i32
  }
  func.func @transform_2(%arg0: i32) -> (i32, i32) {
    %c0_i32 = arith.constant 0 : i32
    %c0_i32_0 = arith.constant 0 : i32
    %c0_i32_1 = arith.constant 0 : i32
    return %c0_i32, %c0_i32_0 : i32, i32
  }
  func.func @transform_3(%arg0: i32) -> (i32, i32) {
    %c0_i32 = arith.constant 0 : i32
    %c0_i32_0 = arith.constant 0 : i32
    %c0_i32_1 = arith.constant 0 : i32
    return %c0_i32, %c0_i32_0 : i32, i32
  }
  func.func @transform_4(%arg0: i32) -> (i32, i32) {
    %c0_i32 = arith.constant 0 : i32
    %c0_i32_0 = arith.constant 0 : i32
    %c0_i32_1 = arith.constant 0 : i32
    return %c0_i32, %c0_i32_0 : i32, i32
  }
  func.func @transform_5(%arg0: i32) -> (i32, i32) {
    %c0_i32 = arith.constant 0 : i32
    %c0_i32_0 = arith.constant 0 : i32
    %c0_i32_1 = arith.constant 0 : i32
    return %c0_i32, %c0_i32_0 : i32, i32
  }
  func.func @transform_6(%arg0: i32) -> (i32, i32) {
    %c0_i32 = arith.constant 0 : i32
    %c0_i32_0 = arith.constant 0 : i32
    %c0_i32_1 = arith.constant 0 : i32
    return %c0_i32, %c0_i32_0 : i32, i32
  }
  func.func @transform_7(%arg0: i32) -> (i32, i32) {
    %c0_i32 = arith.constant 0 : i32
    %c0_i32_0 = arith.constant 0 : i32
    return %arg0, %c0_i32 : i32, i32
  }
}

</mosaic_0001>

<llo_original>
// kernel: tpu_custom_call.1
$region0: #{tpu_custom_call.1}
  #allocation0 [shape = 'u32[]', space=smem, size = 0x4, offset = 0x4, fixed_abs, tag = 'smem constant byte address 0x4 - core index']
  #allocation1 [shape = 'u32[72,128]{1,0:T(1,128)}', space=vmem, size = 0x9000, scoped, tag = 'internal scratch']
  %s0 = inlined_call_operand.vmem [shape: f32[64,32], index: 0, kind: input, shape index: {}]
  %s1 = inlined_call_operand.vmem [shape: bf16[32,128], index: 1, kind: input, shape index: {}]
  %s2 = inlined_call_operand.vmem [shape: f32[1,128], index: 2, kind: input, shape index: {}]
  %s3 = inlined_call_operand.vmem [shape: bf16[128,128], index: 3, kind: input, shape index: {}]
  %s4 = inlined_call_operand.vmem [shape: f32[1,128], index: 4, kind: input, shape index: {}]
  %s5 = inlined_call_operand.hbm [shape: bf16[128,128], index: 5, kind: input, shape index: {}]
  %s6 = inlined_call_operand.vmem [shape: f32[1,128], index: 6, kind: input, shape index: {}]
  %s7 = inlined_call_operand.hbm [shape: bf16[64,128], index: 7, kind: output, shape index: {}]
  %s8 = sld [smem:[#allocation0]]
  $region42: #{tpu_custom_call.1} parent=0
    _
  %s10 = ssub.s32 1, %s8
  %s11 = scalar_select 0, %s10, %s8
  $region1: #{tpu_custom_call.1} parent=0
    #allocation2 [shape = 'u8[32768]{0}', space=vmem, size = 0x8000, scoped, tag = 'input window, operand 5, single buffered']
    #allocation3 [shape = 's32[1]{0}', space=sflag, size = 0x4, scoped, tag = 'scoped memory for tpu_custom_call.1']
    #allocation4 [shape = 's32[1]{0}', space=sflag, size = 0x4, scoped, tag = 'scoped memory for tpu_custom_call.1']
    #allocation5 [shape = 'u8[16384]{0}', space=vmem, size = 0x4000, scoped, tag = 'output window, operand 0, single buffered']
    %12 = vsyncpa [#allocation3], 0
    %13 = vsyncpa [#allocation4], 0
    // Predicated region
    $region2: #{tpu_custom_call.1} parent=1 // pred_check
      _
    $region3: #{tpu_custom_call.1} parent=1 // pred_check_branch
      %15 = sbr.rel (0) target = $region5
    $region4: #{tpu_custom_call.1} parent=1 // pred_region
      _
    $region5: #{tpu_custom_call.1} parent=1 // pred_fallthru
      _
    // Predicated region
    $region6: #{tpu_custom_call.1} parent=1 // pred_check
      _
    $region7: #{tpu_custom_call.1} parent=1 // pred_check_branch
      %17 = sbr.rel (0) target = $region9
    $region8: #{tpu_custom_call.1} parent=1 // pred_region
      _
    $region9: #{tpu_custom_call.1} parent=1 // pred_fallthru
      _
    // Predicated region
    $region10: #{tpu_custom_call.1} parent=1 // pred_check
      _
    $region11: #{tpu_custom_call.1} parent=1 // pred_check_branch
      %19 = sbr.rel (0) target = $region13
    $region12: #{tpu_custom_call.1} parent=1 // pred_region
      _
    $region13: #{tpu_custom_call.1} parent=1 // pred_fallthru
      _
    // Predicated region
    $region14: #{tpu_custom_call.1} parent=1 // pred_check
      _
    $region15: #{tpu_custom_call.1} parent=1 // pred_check_branch
      %21 = sbr.rel (0) target = $region17
    $region16: #{tpu_custom_call.1} parent=1 // pred_region
      _
    $region17: #{tpu_custom_call.1} parent=1 // pred_fallthru
      _
    // Predicated region
    $region18: #{tpu_custom_call.1} parent=1 // pred_check
      _
    $region19: #{tpu_custom_call.1} parent=1 // pred_check_branch
      %23 = sbr.rel (0) target = $region21
    $region20: #{tpu_custom_call.1} parent=1 // pred_region
      _
    $region21: #{tpu_custom_call.1} parent=1 // pred_fallthru
      _
    // Predicated region
    $region22: #{tpu_custom_call.1} parent=1 // pred_check
      _
    $region23: #{tpu_custom_call.1} parent=1 // pred_check_branch
      %25 = sbr.rel (0) target = $region25
    $region24: #{tpu_custom_call.1} parent=1 // pred_region
      %27 = vsyncadd [#allocation3], 0
      %s28 = sshll.u32 %s5, 4
      %s29 = int_to_ptr.hbm [resolvable:$true] %s28
      %s30 = sshll.u32 [#allocation2], 4
      %s31 = int_to_ptr.vmem [resolvable:$true] %s30
      %36 = dma.hbm_to_vmem [thread:$0]  %s29, 1024, %s31, [#allocation3], 64, 64, 4
    $region25: #{tpu_custom_call.1} parent=1 // pred_fallthru
      _
    // Predicated region
    $region26: #{tpu_custom_call.1} parent=1 // pred_check
      _
    $region27: #{tpu_custom_call.1} parent=1 // pred_check_branch
      %38 = sbr.rel (0) target = $region29
    $region28: #{tpu_custom_call.1} parent=1 // pred_region
      _
    $region29: #{tpu_custom_call.1} parent=1 // pred_fallthru
      _
    // Predicated region
    $region30: #{tpu_custom_call.1} parent=1 // pred_check
      _
    $region31: #{tpu_custom_call.1} parent=1 // pred_check_branch
      %40 = sbr.rel (0) target = $region33
    $region32: #{tpu_custom_call.1} parent=1 // pred_region
      %42 = dma.done [#allocation3], 1024
    $region33: #{tpu_custom_call.1} parent=1 // pred_fallthru
      _
    %v44 = vld [vmem:[%s0] sm:$0xff]
    %v45 = vld [vmem:[%s0 + $0x8] sm:$0xff]
    %v46 = vld [vmem:[%s0 + $0x10] sm:$0xff]
    %v47 = vld [vmem:[%s0 + $0x18] sm:$0xff]
    %v48 = vld [vmem:[%s0 + $0x20] sm:$0xff]
    %v49 = vld [vmem:[%s0 + $0x28] sm:$0xff]
    %v50 = vld [vmem:[%s0 + $0x30] sm:$0xff]
    %v51 = vld [vmem:[%s0 + $0x38] sm:$0xff]
    %v52 = vpack.c.bf16 %v45, %v44
    %v53 = vpack.c.bf16 %v47, %v46
    %v54 = vpack.c.bf16 %v49, %v48
    %v55 = vpack.c.bf16 %v51, %v50
    %v56 = vld [vmem:[%s1] sm:$0xf]
    %v57 = vld [vmem:[%s1 + $0x4] sm:$0xf]
    %v58 = vld [vmem:[%s1 + $0x8] sm:$0xf]
    %v59 = vld [vmem:[%s1 + $0xc] sm:$0xf]
    %v60 = vld [vmem:[%s2] sm:$0x1]
    %v62 = vperm.slane %v60, 0
    %v68 = vunpack.c.l.b16 %v56
    %v69 = vunpack.c.l.b16 %v57
    %v70 = vunpack.c.l.b16 %v58
    %v71 = vunpack.c.l.b16 %v59
    %v72 = vpack.c.b16 %v69, %v68
    %v73 = vpack.c.b16 %v71, %v70
    %vm76 = vcmask 261120
    %v78 = vsel %vm76, %v52, 0
    %v81 = vsel %vm76, %v53, 0
    %v84 = vsel %vm76, %v54, 0
    %v87 = vsel %vm76, %v55, 0
    %89 = vmatpush.bf16.msra.mxu0 0
    %90 = vmatpush.bf16.msra.mxu0 0
    %91 = vmatpush.bf16.msra.mxu0 0
    %92 = vmatpush.bf16.msra.mxu0 0
    %93 = vmatpush.bf16.msra.mxu0 0
    %94 = vmatpush.bf16.msra.mxu0 0
    %95 = vmatpush.bf16.msra.mxu0 %v73
    %96 = vmatpush.bf16.msra.mxu0 %v72
    %97 = vmatmul.bf16.gmra.mxu0 %v78
    %v98 = vpop.f32.mrf.mxu0
    %v99 = vadd.f32 %v62, %v98
    %v100 = vpop.f32.mrf.mxu0
    %v101 = vadd.f32 %v62, %v100
    %102 = vmatmul.bf16.gmra.mxu0 %v81
    %v103 = vpop.f32.mrf.mxu0
    %v104 = vadd.f32 %v62, %v103
    %v105 = vpop.f32.mrf.mxu0
    %v106 = vadd.f32 %v62, %v105
    %107 = vmatmul.bf16.gmra.mxu0 %v84
    %v108 = vpop.f32.mrf.mxu0
    %v109 = vadd.f32 %v62, %v108
    %v110 = vpop.f32.mrf.mxu0
    %v111 = vadd.f32 %v62, %v110
    %112 = vmatmul.bf16.gmra.mxu0 %v87
    %v113 = vpop.f32.mrf.mxu0
    %v114 = vadd.f32 %v62, %v113
    %v115 = vpop.f32.mrf.mxu0
    %v116 = vadd.f32 %v62, %v115
    %117 = vdwg.mxu0
    %v118 = vmax.f32 %v99, 0.0
    %v119 = vmax.f32 %v101, 0.0
    %v120 = vmax.f32 %v104, 0.0
    %v121 = vmax.f32 %v106, 0.0
    %v122 = vmax.f32 %v109, 0.0
    %v123 = vmax.f32 %v111, 0.0
    %v124 = vmax.f32 %v114, 0.0
    %v125 = vmax.f32 %v116, 0.0
    %v126 = vpack.c.bf16 %v119, %v118
    %v127 = vpack.c.bf16 %v121, %v120
    %v128 = vpack.c.bf16 %v123, %v122
    %v129 = vpack.c.bf16 %v125, %v124
    %v130 = vld [vmem:[%s3] sm:$0xf]
    %v131 = vld [vmem:[%s3 + $0x4] sm:$0xf]
    %v132 = vld [vmem:[%s3 + $0x8] sm:$0xf]
    %v133 = vld [vmem:[%s3 + $0xc] sm:$0xf]
    %v134 = vld [vmem:[%s3 + $0x10] sm:$0xf]
    %v135 = vld [vmem:[%s3 + $0x14] sm:$0xf]
    %v136 = vld [vmem:[%s3 + $0x18] sm:$0xf]
    %v137 = vld [vmem:[%s3 + $0x1c] sm:$0xf]
    %v138 = vld [vmem:[%s3 + $0x20] sm:$0xf]
    %v139 = vld [vmem:[%s3 + $0x24] sm:$0xf]
    %v140 = vld [vmem:[%s3 + $0x28] sm:$0xf]
    %v141 = vld [vmem:[%s3 + $0x2c] sm:$0xf]
    %v142 = vld [vmem:[%s3 + $0x30] sm:$0xf]
    %v143 = vld [vmem:[%s3 + $0x34] sm:$0xf]
    %v144 = vld [vmem:[%s3 + $0x38] sm:$0xf]
    %v145 = vld [vmem:[%s3 + $0x3c] sm:$0xf]
    %v146 = vld [vmem:[%s4] sm:$0x1]
    %v148 = vperm.slane %v146, 0
    %v166 = vunpack.c.l.b16 %v130
    %v167 = vunpack.c.l.b16 %v131
    %v168 = vunpack.c.l.b16 %v132
    %v169 = vunpack.c.l.b16 %v133
    %v170 = vunpack.c.l.b16 %v134
    %v171 = vunpack.c.l.b16 %v135
    %v172 = vunpack.c.l.b16 %v136
    %v173 = vunpack.c.l.b16 %v137
    %v174 = vunpack.c.l.b16 %v138
    %v175 = vunpack.c.l.b16 %v139
    %v176 = vunpack.c.l.b16 %v140
    %v177 = vunpack.c.l.b16 %v141
    %v178 = vunpack.c.l.b16 %v142
    %v179 = vunpack.c.l.b16 %v143
    %v180 = vunpack.c.l.b16 %v144
    %v181 = vunpack.c.l.b16 %v145
    %v182 = vpack.c.b16 %v167, %v166
    %v183 = vpack.c.b16 %v169, %v168
    %v184 = vpack.c.b16 %v171, %v170
    %v185 = vpack.c.b16 %v173, %v172
    %v186 = vpack.c.b16 %v175, %v174
    %v187 = vpack.c.b16 %v177, %v176
    %v188 = vpack.c.b16 %v179, %v178
    %v189 = vpack.c.b16 %v181, %v180
    %198 = vmatpush.bf16.msra.mxu0 %v189
    %199 = vmatpush.bf16.msra.mxu0 %v188
    %200 = vmatpush.bf16.msra.mxu0 %v187
    %201 = vmatpush.bf16.msra.mxu0 %v186
    %202 = vmatpush.bf16.msra.mxu0 %v185
    %203 = vmatpush.bf16.msra.mxu0 %v184
    %204 = vmatpush.bf16.msra.mxu0 %v183
    %205 = vmatpush.bf16.msra.mxu0 %v182
    %206 = vmatmul.bf16.gmra.mxu0 %v126
    %v207 = vpop.f32.mrf.mxu0
    %v208 = vadd.f32 %v148, %v207
    %v209 = vpop.f32.mrf.mxu0
    %v210 = vadd.f32 %v148, %v209
    %211 = vmatmul.bf16.gmra.mxu0 %v127
    %v212 = vpop.f32.mrf.mxu0
    %v213 = vadd.f32 %v148, %v212
    %v214 = vpop.f32.mrf.mxu0
    %v215 = vadd.f32 %v148, %v214
    %216 = vmatmul.bf16.gmra.mxu0 %v128
    %v217 = vpop.f32.mrf.mxu0
    %v218 = vadd.f32 %v148, %v217
    %v219 = vpop.f32.mrf.mxu0
    %v220 = vadd.f32 %v148, %v219
    %221 = vmatmul.bf16.gmra.mxu0 %v129
    %v222 = vpop.f32.mrf.mxu0
    %v223 = vadd.f32 %v148, %v222
    %v224 = vpop.f32.mrf.mxu0
    %v225 = vadd.f32 %v148, %v224
    %226 = vdwg.mxu0
    %v227 = vmax.f32 %v208, 0.0
    %v228 = vmax.f32 %v210, 0.0
    %v229 = vmax.f32 %v213, 0.0
    %v230 = vmax.f32 %v215, 0.0
    %v231 = vmax.f32 %v218, 0.0
    %v232 = vmax.f32 %v220, 0.0
    %v233 = vmax.f32 %v223, 0.0
    %v234 = vmax.f32 %v225, 0.0
    %v235 = vpack.c.bf16 %v228, %v227
    %v236 = vpack.c.bf16 %v230, %v229
    %v237 = vpack.c.bf16 %v232, %v231
    %v238 = vpack.c.bf16 %v234, %v233
    %v239 = vld [vmem:[#allocation2] sm:$0xf]
    %v240 = vld [vmem:[#allocation2 + $0x4] sm:$0xf]
    %v241 = vld [vmem:[#allocation2 + $0x8] sm:$0xf]
    %v242 = vld [vmem:[#allocation2 + $0xc] sm:$0xf]
    %v243 = vld [vmem:[#allocation2 + $0x10] sm:$0xf]
    %v244 = vld [vmem:[#allocation2 + $0x14] sm:$0xf]
    %v245 = vld [vmem:[#allocation2 + $0x18] sm:$0xf]
    %v246 = vld [vmem:[#allocation2 + $0x1c] sm:$0xf]
    %v247 = vld [vmem:[#allocation2 + $0x20] sm:$0xf]
    %v248 = vld [vmem:[#allocation2 + $0x24] sm:$0xf]
    %v249 = vld [vmem:[#allocation2 + $0x28] sm:$0xf]
    %v250 = vld [vmem:[#allocation2 + $0x2c] sm:$0xf]
    %v251 = vld [vmem:[#allocation2 + $0x30] sm:$0xf]
    %v252 = vld [vmem:[#allocation2 + $0x34] sm:$0xf]
    %v253 = vld [vmem:[#allocation2 + $0x38] sm:$0xf]
    %v254 = vld [vmem:[#allocation2 + $0x3c] sm:$0xf]
    %v255 = vld [vmem:[%s6] sm:$0x1]
    %v257 = vperm.slane %v255, 0
    %v275 = vunpack.c.l.b16 %v239
    %v276 = vunpack.c.l.b16 %v240
    %v277 = vunpack.c.l.b16 %v241
    %v278 = vunpack.c.l.b16 %v242
    %v279 = vunpack.c.l.b16 %v243
    %v280 = vunpack.c.l.b16 %v244
    %v281 = vunpack.c.l.b16 %v245
    %v282 = vunpack.c.l.b16 %v246
    %v283 = vunpack.c.l.b16 %v247
    %v284 = vunpack.c.l.b16 %v248
    %v285 = vunpack.c.l.b16 %v249
    %v286 = vunpack.c.l.b16 %v250
    %v287 = vunpack.c.l.b16 %v251
    %v288 = vunpack.c.l.b16 %v252
    %v289 = vunpack.c.l.b16 %v253
    %v290 = vunpack.c.l.b16 %v254
    %v291 = vpack.c.b16 %v276, %v275
    %v292 = vpack.c.b16 %v278, %v277
    %v293 = vpack.c.b16 %v280, %v279
    %v294 = vpack.c.b16 %v282, %v281
    %v295 = vpack.c.b16 %v284, %v283
    %v296 = vpack.c.b16 %v286, %v285
    %v297 = vpack.c.b16 %v288, %v287
    %v298 = vpack.c.b16 %v290, %v289
    %307 = vmatpush.bf16.msra.mxu0 %v298
    %308 = vmatpush.bf16.msra.mxu0 %v297
    %309 = vmatpush.bf16.msra.mxu0 %v296
    %310 = vmatpush.bf16.msra.mxu0 %v295
    %311 = vmatpush.bf16.msra.mxu0 %v294
    %312 = vmatpush.bf16.msra.mxu0 %v293
    %313 = vmatpush.bf16.msra.mxu0 %v292
    %314 = vmatpush.bf16.msra.mxu0 %v291
    %315 = vmatmul.bf16.gmra.mxu0 %v235
    %v316 = vpop.f32.mrf.mxu0
    %v317 = vadd.f32 %v257, %v316
    %v318 = vpop.f32.mrf.mxu0
    %v319 = vadd.f32 %v257, %v318
    %320 = vmatmul.bf16.gmra.mxu0 %v236
    %v321 = vpop.f32.mrf.mxu0
    %v322 = vadd.f32 %v257, %v321
    %v323 = vpop.f32.mrf.mxu0
    %v324 = vadd.f32 %v257, %v323
    %325 = vmatmul.bf16.gmra.mxu0 %v237
    %v326 = vpop.f32.mrf.mxu0
    %v327 = vadd.f32 %v257, %v326
    %v328 = vpop.f32.mrf.mxu0
    %v329 = vadd.f32 %v257, %v328
    %330 = vmatmul.bf16.gmra.mxu0 %v238
    %v331 = vpop.f32.mrf.mxu0
    %v332 = vadd.f32 %v257, %v331
    %v333 = vpop.f32.mrf.mxu0
    %v334 = vadd.f32 %v257, %v333
    %335 = vdwg.mxu0
    %v336 = vpack.c.bf16 %v317, %v317
    %v337 = vpack.c.bf16 %v319, %v319
    %v338 = vpack.c.bf16 %v322, %v322
    %v339 = vpack.c.bf16 %v324, %v324
    %v340 = vpack.c.bf16 %v327, %v327
    %v341 = vpack.c.bf16 %v329, %v329
    %v342 = vpack.c.bf16 %v332, %v332
    %v343 = vpack.c.bf16 %v334, %v334
    %344 = vst [vmem:[#allocation5] sm:$0xf] %v336
    %345 = vst [vmem:[#allocation5 + $0x4] sm:$0xf] %v337
    %346 = vst [vmem:[#allocation5 + $0x8] sm:$0xf] %v338
    %347 = vst [vmem:[#allocation5 + $0xc] sm:$0xf] %v339
    %348 = vst [vmem:[#allocation5 + $0x10] sm:$0xf] %v340
    %349 = vst [vmem:[#allocation5 + $0x14] sm:$0xf] %v341
    %350 = vst [vmem:[#allocation5 + $0x18] sm:$0xf] %v342
    %351 = vst [vmem:[#allocation5 + $0x1c] sm:$0xf] %v343
    // Predicated region
    $region34: #{tpu_custom_call.1} parent=1 // pred_check
      _
    $region35: #{tpu_custom_call.1} parent=1 // pred_check_branch
      %353 = sbr.rel (0) target = $region37
    $region36: #{tpu_custom_call.1} parent=1 // pred_region
      %355 = vsyncadd [#allocation4], 0
      %s356 = sshll.u32 [#allocation5], 4
      %s357 = int_to_ptr.vmem [resolvable:$true] %s356
      %s358 = sshll.u32 %s7, 4
      %s359 = int_to_ptr.hbm [resolvable:$true] %s358
      %364 = dma.vmem_to_hbm [thread:$0]  %s357, 512, %s359, [#allocation4], 64, 64, 4
    $region37: #{tpu_custom_call.1} parent=1 // pred_fallthru
      _
    // Predicated region
    $region38: #{tpu_custom_call.1} parent=1 // pred_check
      _
    $region39: #{tpu_custom_call.1} parent=1 // pred_check_branch
      %366 = sbr.rel (0) target = $region41
    $region40: #{tpu_custom_call.1} parent=1 // pred_region
      %368 = dma.done [#allocation4], 512
    $region41: #{tpu_custom_call.1} parent=1 // pred_fallthru
      _
    %369 = vsyncpa [#allocation3], 1
    %370 = vsyncpa [#allocation4], 1

</llo_original>
